<compile_context>
chip_gen: v5e
topology: v5e:2x2
jax: 0.10.0
libtpu: 0.0.40
codegen_flags: <defaults>
</compile_context>

<pallas_src>
import jax
import jax.numpy as jnp
from jax.experimental import pallas as pl
from jax.experimental.pallas import tpu as pltpu

_VMEM_LIMIT_BYTES = 48 << 20          # explicit scoped-VMEM limit (all gens)
_VMEM_TILE_BUDGET = int(0.6 * _VMEM_LIMIT_BYTES)   # headroom for compiler temps


def _round_up(x, m):
    return ((x + m - 1) // m) * m


def _choose_batch_tile(batch, feature_dim, num_class):
    """Pick the batch tile: as fat as the VMEM budget allows, but with >=2
    grid steps when the batch is large enough for v7x megacore sharding."""
    # Per-row VMEM bytes for one batch tile:
    #   2 x bf16 x tile (double-buffered)  + 2 x f32 out tile (double-buffered)
    #   + h1 (f32 + bf16 copy) + h2 (f32 + bf16 copy) + h3 (f32)
    per_row = (2 * 2 * feature_dim
               + 2 * 4 * num_class
               + 256 * (4 + 2)
               + 128 * (4 + 2)
               + 4 * num_class)
    # Resident weights/biases (conservatively assume double-buffered).
    weight_bytes = (2 * (feature_dim * 256 + 256 * 128 + 128 * num_class) * 2
                    + 4 * (256 + 128 + num_class) * 2)
    avail = max(_VMEM_TILE_BUDGET - weight_bytes, 1 << 20)
    tb_vmem = max((avail // per_row) // 8 * 8, 8)

    # v7x: guarantee >=2 grid steps (one per TensorCore) once B >= 16.
    min_steps = 2 if batch >= 16 else 1
    tb_split = _round_up(pl.cdiv(batch, min_steps), 8)

    # 8192-row hard cap: plenty to amortize the ~0.35 us/step overhead.
    return max(min(tb_vmem, tb_split, 8192), 8)


def mlp_kernel(x_ref, w1_ref, b1_ref, w2_ref, b2_ref, w3_ref, b3_ref, o_ref):
    # fc1 + relu : bf16 operands -> f32 accumulation on the MXU
    h1 = jnp.dot(x_ref[...], w1_ref[...], preferred_element_type=jnp.float32)
    h1 = jnp.maximum(h1 + b1_ref[...], 0.0)
    # fc2 + relu
    h2 = jnp.dot(h1.astype(jnp.bfloat16), w2_ref[...],
                 preferred_element_type=jnp.float32)
    h2 = jnp.maximum(h2 + b2_ref[...], 0.0)
    # fc3 + sigmoid
    h3 = jnp.dot(h2.astype(jnp.bfloat16), w3_ref[...],
                 preferred_element_type=jnp.float32)
    h3 = h3 + b3_ref[...]
    # Exact sigmoid: the kernel is MXU-bound so the divide is hidden, and the
    # result is guaranteed to lie in [0, 1] (exp overflow -> 1/(1+inf) = 0).
    o_ref[...] = 1.0 / (1.0 + jnp.exp(-h3))


def mlp_forward(x, params):
    """x: any shape (B, ...); flattened to (B, featureDim) like x.view(B, -1)."""
    w1, b1, w2, b2, w3, b3 = params
    B = x.shape[0]
    # Single cast to bf16 (subsumes the PyTorch x.float(); avoids an extra
    # full-array f32 materialization in HBM for non-f32 inputs).
    x2d = x.reshape(B, -1).astype(jnp.bfloat16)
    feature_dim = x2d.shape[1]
    num_class = w3.shape[1]

    # bf16 matmul operands; biases and accumulation remain f32.
    w1b = w1.astype(jnp.bfloat16)
    w2b = w2.astype(jnp.bfloat16)
    w3b = w3.astype(jnp.bfloat16)

    tb = _choose_batch_tile(B, feature_dim, num_class)
    b_pad = _round_up(B, tb)
    if b_pad != B:
        x2d = jnp.pad(x2d, ((0, b_pad - B), (0, 0)))
    num_steps = b_pad // tb

    def resident(a):
        # Weights/biases: same block every grid step -> stays VMEM-resident.
        return pl.BlockSpec(a.shape, lambda i: (0,) * a.ndim)

    flops = 2 * b_pad * (feature_dim * 256 + 256 * 128 + 128 * num_class)
    bytes_accessed = (b_pad * feature_dim * 2            # bf16 x in
                      + b_pad * num_class * 4            # f32 out
                      + (feature_dim * 256 + 256 * 128 + 128 * num_class) * 2
                      + (256 + 128 + num_class) * 4)     # weights + biases
    cost = pl.CostEstimate(flops=flops,
                           transcendentals=b_pad * num_class,
                           bytes_accessed=bytes_accessed)

    out = pl.pallas_call(
        mlp_kernel,
        out_shape=jax.ShapeDtypeStruct((b_pad, num_class), jnp.float32),
        grid_spec=pltpu.PrefetchScalarGridSpec(
            num_scalar_prefetch=0,
            grid=(num_steps,),
            in_specs=[
                pl.BlockSpec((tb, feature_dim), lambda i: (i, 0)),
                resident(w1b), resident(b1),
                resident(w2b), resident(b2),
                resident(w3b), resident(b3),
            ],
            # Output deliberately stays at num_class lanes (no pad to 128):
            # masked vst traffic is negligible in the MXU-bound regime.
            out_specs=pl.BlockSpec((tb, num_class), lambda i: (i, 0)),
        ),
        compiler_params=pltpu.CompilerParams(
            dimension_semantics=("parallel",),      # v7x: shard batch over 2 TCs
            vmem_limit_bytes=_VMEM_LIMIT_BYTES),
        cost_estimate=cost,
    )(x2d, w1b, b1, w2b, b2, w3b, b3)

    return out[:B]


def init_params(key, feature_dim, num_class):
    """Deterministic init; weights stored as (in, out), biases as (1, out)."""
    ks = jax.random.split(key, 6)

    def lin(kw, kb, fan_in, fan_out):
        bound = 1.0 / jnp.sqrt(fan_in)
        w = jax.random.uniform(kw, (fan_in, fan_out), jnp.float32, -bound, bound)
        b = jax.random.uniform(kb, (1, fan_out), jnp.float32, -bound, bound)
        return w, b

    w1, b1 = lin(ks[0], ks[1], feature_dim, 256)
    w2, b2 = lin(ks[2], ks[3], 256, 128)
    w3, b3 = lin(ks[4], ks[5], 128, num_class)
    return (w1, b1, w2, b2, w3, b3)


if __name__ == "__main__":
    key = jax.random.PRNGKey(0)
    k_x, k_p = jax.random.split(key)

    batch, num_class = 8, 10
    # Input like an un-flattened feature map; forward flattens it: 4*4*4 = 64
    x = jax.random.normal(k_x, (batch, 4, 4, 4), dtype=jnp.float32)
    feature_dim = 4 * 4 * 4

    params = init_params(k_p, feature_dim, num_class)

    out = mlp_forward(x, params)
    out = jax.block_until_ready(out)

    assert out.shape == (batch, num_class)
    assert out.dtype == jnp.float32
    assert bool(jnp.all((out >= 0.0) & (out <= 1.0)))

    # Cross-check against a pure-JAX reference that mirrors the kernel's
    # bf16-operand / f32-accumulation matmuls (bf16 rounding => tolerance
    # loosened vs a full-f32 PyTorch-parity check — intentional tradeoff).
    w1, b1, w2, b2, w3, b3 = params
    xr = x.reshape(batch, -1).astype(jnp.bfloat16)
    h1 = jnp.maximum(
        jnp.dot(xr, w1.astype(jnp.bfloat16),
                preferred_element_type=jnp.float32) + b1, 0.0)
    h2 = jnp.maximum(
        jnp.dot(h1.astype(jnp.bfloat16), w2.astype(jnp.bfloat16),
                preferred_element_type=jnp.float32) + b2, 0.0)
    h3 = jnp.dot(h2.astype(jnp.bfloat16), w3.astype(jnp.bfloat16),
                 preferred_element_type=jnp.float32) + b3
    ref = 1.0 / (1.0 + jnp.exp(-h3))
    assert jnp.allclose(out, ref, atol=1e-2, rtol=1e-2)

    print("KERNEL_OK")
</pallas_src>

<mosaic_0001>
module attributes {stable_mosaic.version = 11 : i64} {
  func.func @mlp_kernel(%arg0: i32, %arg1: memref<8x64xbf16, #tpu.memory_space<vmem>>, %arg2: memref<64x256xbf16, #tpu.memory_space<vmem>>, %arg3: memref<1x256xf32, #tpu.memory_space<vmem>>, %arg4: memref<256x128xbf16, #tpu.memory_space<vmem>>, %arg5: memref<1x128xf32, #tpu.memory_space<vmem>>, %arg6: memref<128x10xbf16, #tpu.memory_space<vmem>>, %arg7: memref<1x10xf32, #tpu.memory_space<vmem>>, %arg8: memref<8x10xf32, #tpu.memory_space<vmem>>) attributes {dimension_semantics = [#tpu.dimension_semantics<parallel>], iteration_bounds = array<i64: 1>, scalar_prefetch = 0 : i64, scratch_operands = 0 : i64, tpu.core_type = #tpu.core_type<tc>, window_params = [{transform_indices = @transform_0, window_bounds = array<i64: 8, 64>}, {pipeline_mode = #tpu.pipeline_mode<synchronous>, transform_indices = @transform_1, window_bounds = array<i64: 64, 256>}, {pipeline_mode = #tpu.pipeline_mode<synchronous>, transform_indices = @transform_2, window_bounds = array<i64: 1, 256>}, {pipeline_mode = #tpu.pipeline_mode<synchronous>, transform_indices = @transform_3, window_bounds = array<i64: 256, 128>}, {pipeline_mode = #tpu.pipeline_mode<synchronous>, transform_indices = @transform_4, window_bounds = array<i64: 1, 128>}, {pipeline_mode = #tpu.pipeline_mode<synchronous>, transform_indices = @transform_5, window_bounds = array<i64: 128, 10>}, {pipeline_mode = #tpu.pipeline_mode<synchronous>, transform_indices = @transform_6, window_bounds = array<i64: 1, 10>}, {transform_indices = @transform_7, window_bounds = array<i64: 8, 10>}]} {
    %c0 = arith.constant 0 : index
    %c0_0 = arith.constant 0 : index
    %0 = vector.load %arg1[%c0, %c0_0] : memref<8x64xbf16, #tpu.memory_space<vmem>>, vector<8x64xbf16>
    %c0_1 = arith.constant 0 : index
    %c0_2 = arith.constant 0 : index
    %1 = vector.load %arg2[%c0_1, %c0_2] : memref<64x256xbf16, #tpu.memory_space<vmem>>, vector<64x256xbf16>
    %cst = arith.constant dense<0.000000e+00> : vector<8x256xf32>
    %2 = tpu.matmul %0, %1, %cst {dimension_numbers = #tpu.dot_dimension_numbers<[1], [0], [0], [1], [0, 0, 1, 1], [], []>} : vector<8x64xbf16>, vector<64x256xbf16>, vector<8x256xf32> -> vector<8x256xf32>
    %c0_3 = arith.constant 0 : index
    %c0_4 = arith.constant 0 : index
    %3 = vector.load %arg3[%c0_3, %c0_4] : memref<1x256xf32, #tpu.memory_space<vmem>>, vector<1x256xf32>
    %4 = vector.broadcast %3 : vector<1x256xf32> to vector<8x256xf32>
    %5 = arith.addf %2, %4 : vector<8x256xf32>
    %cst_5 = arith.constant 0.000000e+00 : f32
    %6 = vector.broadcast %cst_5 : f32 to vector<8x256xf32>
    %7 = arith.maximumf %5, %6 : vector<8x256xf32>
    %8 = arith.truncf %7 : vector<8x256xf32> to vector<8x256xbf16>
    %c0_6 = arith.constant 0 : index
    %c0_7 = arith.constant 0 : index
    %9 = vector.load %arg4[%c0_6, %c0_7] : memref<256x128xbf16, #tpu.memory_space<vmem>>, vector<256x128xbf16>
    %cst_8 = arith.constant dense<0.000000e+00> : vector<8x128xf32>
    %10 = tpu.matmul %8, %9, %cst_8 {dimension_numbers = #tpu.dot_dimension_numbers<[1], [0], [0], [1], [0, 0, 1, 1], [], []>} : vector<8x256xbf16>, vector<256x128xbf16>, vector<8x128xf32> -> vector<8x128xf32>
    %c0_9 = arith.constant 0 : index
    %c0_10 = arith.constant 0 : index
    %11 = vector.load %arg5[%c0_9, %c0_10] : memref<1x128xf32, #tpu.memory_space<vmem>>, vector<1x128xf32>
    %12 = vector.broadcast %11 : vector<1x128xf32> to vector<8x128xf32>
    %13 = arith.addf %10, %12 : vector<8x128xf32>
    %cst_11 = arith.constant 0.000000e+00 : f32
    %14 = vector.broadcast %cst_11 : f32 to vector<8x128xf32>
    %15 = arith.maximumf %13, %14 : vector<8x128xf32>
    %16 = arith.truncf %15 : vector<8x128xf32> to vector<8x128xbf16>
    %c0_12 = arith.constant 0 : index
    %c0_13 = arith.constant 0 : index
    %17 = vector.load %arg6[%c0_12, %c0_13] : memref<128x10xbf16, #tpu.memory_space<vmem>>, vector<128x10xbf16>
    %cst_14 = arith.constant dense<0.000000e+00> : vector<8x10xf32>
    %18 = tpu.matmul %16, %17, %cst_14 {dimension_numbers = #tpu.dot_dimension_numbers<[1], [0], [0], [1], [0, 0, 1, 1], [], []>} : vector<8x128xbf16>, vector<128x10xbf16>, vector<8x10xf32> -> vector<8x10xf32>
    %c0_15 = arith.constant 0 : index
    %c0_16 = arith.constant 0 : index
    %19 = vector.load %arg7[%c0_15, %c0_16] : memref<1x10xf32, #tpu.memory_space<vmem>>, vector<1x10xf32>
    %20 = vector.broadcast %19 : vector<1x10xf32> to vector<8x10xf32>
    %21 = arith.addf %18, %20 : vector<8x10xf32>
    %cst_17 = arith.constant 0.000000e+00 : f32
    %22 = vector.broadcast %cst_17 : f32 to vector<8x10xf32>
    %23 = arith.subf %22, %21 : vector<8x10xf32>
    %24 = math.exp %23 : vector<8x10xf32>
    %cst_18 = arith.constant 1.000000e+00 : f32
    %25 = vector.broadcast %cst_18 : f32 to vector<8x10xf32>
    %26 = arith.addf %25, %24 : vector<8x10xf32>
    %cst_19 = arith.constant 1.000000e+00 : f32
    %27 = vector.broadcast %cst_19 : f32 to vector<8x10xf32>
    %28 = arith.divf %27, %26 : vector<8x10xf32>
    %c0_20 = arith.constant 0 : index
    %c0_21 = arith.constant 0 : index
    %29 = vector.load %arg8[%c0_20, %c0_21] : memref<8x10xf32, #tpu.memory_space<vmem>>, vector<8x10xf32>
    tpu.vector_store %arg8[%c0_20, %c0_21], %28 {strides = array<i32>} : memref<8x10xf32, #tpu.memory_space<vmem>>, vector<8x10xf32>,
    return
  }
  func.func @transform_0(%arg0: i32) -> (i32, i32) {
    %c0_i32 = arith.constant 0 : i32
    %c0_i32_0 = arith.constant 0 : i32
    return %arg0, %c0_i32 : i32, i32
  }
  func.func @transform_1(%arg0: i32) -> (i32, i32) {
    %c0_i32 = arith.constant 0 : i32
    %c0_i32_0 = arith.constant 0 : i32
    %c0_i32_1 = arith.constant 0 : i32
    return %c0_i32, %c0_i32_0 : i32, i32
  }
  func.func @transform_2(%arg0: i32) -> (i32, i32) {
    %c0_i32 = arith.constant 0 : i32
    %c0_i32_0 = arith.constant 0 : i32
    %c0_i32_1 = arith.constant 0 : i32
    return %c0_i32, %c0_i32_0 : i32, i32
  }
  func.func @transform_3(%arg0: i32) -> (i32, i32) {
    %c0_i32 = arith.constant 0 : i32
    %c0_i32_0 = arith.constant 0 : i32
    %c0_i32_1 = arith.constant 0 : i32
    return %c0_i32, %c0_i32_0 : i32, i32
  }
  func.func @transform_4(%arg0: i32) -> (i32, i32) {
    %c0_i32 = arith.constant 0 : i32
    %c0_i32_0 = arith.constant 0 : i32
    %c0_i32_1 = arith.constant 0 : i32
    return %c0_i32, %c0_i32_0 : i32, i32
  }
  func.func @transform_5(%arg0: i32) -> (i32, i32) {
    %c0_i32 = arith.constant 0 : i32
    %c0_i32_0 = arith.constant 0 : i32
    %c0_i32_1 = arith.constant 0 : i32
    return %c0_i32, %c0_i32_0 : i32, i32
  }
  func.func @transform_6(%arg0: i32) -> (i32, i32) {
    %c0_i32 = arith.constant 0 : i32
    %c0_i32_0 = arith.constant 0 : i32
    %c0_i32_1 = arith.constant 0 : i32
    return %c0_i32, %c0_i32_0 : i32, i32
  }
  func.func @transform_7(%arg0: i32) -> (i32, i32) {
    %c0_i32 = arith.constant 0 : i32
    %c0_i32_0 = arith.constant 0 : i32
    return %arg0, %c0_i32 : i32, i32
  }
}

</mosaic_0001>

<llo_original>
// kernel: tpu_custom_call.1
$region0: #{tpu_custom_call.1}
  #allocation0 [shape = 'u32[]', space=smem, size = 0x4, offset = 0x4, fixed_abs, tag = 'smem constant byte address 0x4 - core index']
  #allocation1 [shape = 'u32[72,128]{1,0:T(1,128)}', space=vmem, size = 0x9000, scoped, tag = 'internal scratch']
  %s0 = inlined_call_operand.vmem [shape: bf16[8,64], index: 0, kind: input, shape index: {}]
  %s1 = inlined_call_operand.vmem [shape: bf16[64,256], index: 1, kind: input, shape index: {}]
  %s2 = inlined_call_operand.vmem [shape: f32[1,256], index: 2, kind: input, shape index: {}]
  %s3 = inlined_call_operand.hbm [shape: bf16[256,128], index: 3, kind: input, shape index: {}]
  %s4 = inlined_call_operand.vmem [shape: f32[1,128], index: 4, kind: input, shape index: {}]
  %s5 = inlined_call_operand.vmem [shape: bf16[128,10], index: 5, kind: input, shape index: {}]
  %s6 = inlined_call_operand.vmem [shape: f32[1,10], index: 6, kind: input, shape index: {}]
  %s7 = inlined_call_operand.hbm [shape: f32[8,10], index: 7, kind: output, shape index: {}]
  %s8 = sld [smem:[#allocation0]]
  $region42: #{tpu_custom_call.1} parent=0
    _
  %s10 = ssub.s32 1, %s8
  %s11 = scalar_select 0, %s10, %s8
  $region1: #{tpu_custom_call.1} parent=0
    #allocation2 [shape = 'u8[65536]{0}', space=vmem, size = 0x10000, scoped, tag = 'input window, operand 3, single buffered']
    #allocation3 [shape = 's32[1]{0}', space=sflag, size = 0x4, scoped, tag = 'scoped memory for tpu_custom_call.1']
    #allocation4 [shape = 's32[1]{0}', space=sflag, size = 0x4, scoped, tag = 'scoped memory for tpu_custom_call.1']
    #allocation5 [shape = 'u8[4096]{0}', space=vmem, size = 0x1000, scoped, tag = 'output window, operand 0, single buffered']
    %12 = vsyncpa [#allocation3], 0
    %13 = vsyncpa [#allocation4], 0
    // Predicated region
    $region2: #{tpu_custom_call.1} parent=1 // pred_check
      _
    $region3: #{tpu_custom_call.1} parent=1 // pred_check_branch
      %15 = sbr.rel (0) target = $region5
    $region4: #{tpu_custom_call.1} parent=1 // pred_region
      _
    $region5: #{tpu_custom_call.1} parent=1 // pred_fallthru
      _
    // Predicated region
    $region6: #{tpu_custom_call.1} parent=1 // pred_check
      _
    $region7: #{tpu_custom_call.1} parent=1 // pred_check_branch
      %17 = sbr.rel (0) target = $region9
    $region8: #{tpu_custom_call.1} parent=1 // pred_region
      _
    $region9: #{tpu_custom_call.1} parent=1 // pred_fallthru
      _
    // Predicated region
    $region10: #{tpu_custom_call.1} parent=1 // pred_check
      _
    $region11: #{tpu_custom_call.1} parent=1 // pred_check_branch
      %19 = sbr.rel (0) target = $region13
    $region12: #{tpu_custom_call.1} parent=1 // pred_region
      _
    $region13: #{tpu_custom_call.1} parent=1 // pred_fallthru
      _
    // Predicated region
    $region14: #{tpu_custom_call.1} parent=1 // pred_check
      _
    $region15: #{tpu_custom_call.1} parent=1 // pred_check_branch
      %21 = sbr.rel (0) target = $region17
    $region16: #{tpu_custom_call.1} parent=1 // pred_region
      %23 = vsyncadd [#allocation3], 0
      %s24 = sshll.u32 %s3, 4
      %s25 = int_to_ptr.hbm [resolvable:$true] %s24
      %s26 = sshll.u32 [#allocation2], 4
      %s27 = int_to_ptr.vmem [resolvable:$true] %s26
      %32 = dma.hbm_to_vmem [thread:$0]  %s25, 2048, %s27, [#allocation3], 64, 64, 4
    $region17: #{tpu_custom_call.1} parent=1 // pred_fallthru
      _
    // Predicated region
    $region18: #{tpu_custom_call.1} parent=1 // pred_check
      _
    $region19: #{tpu_custom_call.1} parent=1 // pred_check_branch
      %34 = sbr.rel (0) target = $region21
    $region20: #{tpu_custom_call.1} parent=1 // pred_region
      _
    $region21: #{tpu_custom_call.1} parent=1 // pred_fallthru
      _
    // Predicated region
    $region22: #{tpu_custom_call.1} parent=1 // pred_check
      _
    $region23: #{tpu_custom_call.1} parent=1 // pred_check_branch
      %36 = sbr.rel (0) target = $region25
    $region24: #{tpu_custom_call.1} parent=1 // pred_region
      _
    $region25: #{tpu_custom_call.1} parent=1 // pred_fallthru
      _
    // Predicated region
    $region26: #{tpu_custom_call.1} parent=1 // pred_check
      _
    $region27: #{tpu_custom_call.1} parent=1 // pred_check_branch
      %38 = sbr.rel (0) target = $region29
    $region28: #{tpu_custom_call.1} parent=1 // pred_region
      _
    $region29: #{tpu_custom_call.1} parent=1 // pred_fallthru
      _
    // Predicated region
    $region30: #{tpu_custom_call.1} parent=1 // pred_check
      _
    $region31: #{tpu_custom_call.1} parent=1 // pred_check_branch
      %40 = sbr.rel (0) target = $region33
    $region32: #{tpu_custom_call.1} parent=1 // pred_region
      %42 = dma.done [#allocation3], 2048
    $region33: #{tpu_custom_call.1} parent=1 // pred_fallthru
      _
    %v44 = vld [vmem:[%s0] sm:$0xf]
    %v45 = vld [vmem:[%s1] sm:$0xff]
    %v46 = vld [vmem:[%s1 + $0x8] sm:$0xff]
    %v47 = vld [vmem:[%s1 + $0x10] sm:$0xff]
    %v48 = vld [vmem:[%s1 + $0x18] sm:$0xff]
    %v49 = vld [vmem:[%s1 + $0x20] sm:$0xff]
    %v50 = vld [vmem:[%s1 + $0x28] sm:$0xff]
    %v51 = vld [vmem:[%s1 + $0x30] sm:$0xff]
    %v52 = vld [vmem:[%s1 + $0x38] sm:$0xff]
    %v53 = vld [vmem:[%s2] sm:$0x3]
    %v55 = vperm.slane %v53, 0
    %v56 = vperm.slane %v53, 1
    %v67 = vunpack.c.l.b16 %v45
    %v68 = vunpack.c.h.b16 %v45
    %v69 = vunpack.c.l.b16 %v46
    %v70 = vunpack.c.h.b16 %v46
    %v71 = vunpack.c.l.b16 %v47
    %v72 = vunpack.c.h.b16 %v47
    %v73 = vunpack.c.l.b16 %v48
    %v74 = vunpack.c.h.b16 %v48
    %v75 = vunpack.c.l.b16 %v49
    %v76 = vunpack.c.h.b16 %v49
    %v77 = vunpack.c.l.b16 %v50
    %v78 = vunpack.c.h.b16 %v50
    %v79 = vunpack.c.l.b16 %v51
    %v80 = vunpack.c.h.b16 %v51
    %v81 = vunpack.c.l.b16 %v52
    %v82 = vunpack.c.h.b16 %v52
    %v83 = vpack.c.b16 %v69, %v67
    %v84 = vpack.c.b16 %v70, %v68
    %v85 = vpack.c.b16 %v73, %v71
    %v86 = vpack.c.b16 %v74, %v72
    %v87 = vpack.c.b16 %v77, %v75
    %v88 = vpack.c.b16 %v78, %v76
    %v89 = vpack.c.b16 %v81, %v79
    %v90 = vpack.c.b16 %v82, %v80
    %vm99 = vcmask 523264
    %v101 = vsel %vm99, %v44, 0
    %103 = vmatpush.bf16.msra.mxu0 0
    %104 = vmatpush.bf16.msra.mxu0 0
    %105 = vmatpush.bf16.msra.mxu0 0
    %106 = vmatpush.bf16.msra.mxu0 0
    %107 = vmatpush.bf16.msra.mxu0 %v89
    %108 = vmatpush.bf16.msra.mxu0 %v87
    %109 = vmatpush.bf16.msra.mxu0 %v85
    %110 = vmatpush.bf16.msra.mxu0 %v83
    %111 = vmatmul.bf16.gmra.mxu0 %v101
    %v112 = vpop.f32.mrf.mxu0
    %v113 = vadd.f32 %v55, %v112
    %v114 = vpop.f32.mrf.mxu0
    %115 = vdwg.mxu0
    %116 = vmatpush.bf16.msra.mxu0 0
    %117 = vmatpush.bf16.msra.mxu0 0
    %118 = vmatpush.bf16.msra.mxu0 0
    %119 = vmatpush.bf16.msra.mxu0 0
    %120 = vmatpush.bf16.msra.mxu0 %v90
    %121 = vmatpush.bf16.msra.mxu0 %v88
    %122 = vmatpush.bf16.msra.mxu0 %v86
    %123 = vmatpush.bf16.msra.mxu0 %v84
    %124 = vmatmul.bf16.gmra.mxu0 %v101
    %v125 = vpop.f32.mrf.mxu0
    %v126 = vadd.f32 %v56, %v125
    %v127 = vpop.f32.mrf.mxu0
    %128 = vdwg.mxu0
    %v129 = vmax.f32 %v113, 0.0
    %v130 = vmax.f32 %v126, 0.0
    %v131 = vpack.c.bf16 %v129, %v129
    %v132 = vpack.c.bf16 %v130, %v130
    %v133 = vld [vmem:[#allocation2] sm:$0xf]
    %v134 = vld [vmem:[#allocation2 + $0x4] sm:$0xf]
    %v135 = vld [vmem:[#allocation2 + $0x8] sm:$0xf]
    %v136 = vld [vmem:[#allocation2 + $0xc] sm:$0xf]
    %v137 = vld [vmem:[#allocation2 + $0x10] sm:$0xf]
    %v138 = vld [vmem:[#allocation2 + $0x14] sm:$0xf]
    %v139 = vld [vmem:[#allocation2 + $0x18] sm:$0xf]
    %v140 = vld [vmem:[#allocation2 + $0x1c] sm:$0xf]
    %v141 = vld [vmem:[#allocation2 + $0x20] sm:$0xf]
    %v142 = vld [vmem:[#allocation2 + $0x24] sm:$0xf]
    %v143 = vld [vmem:[#allocation2 + $0x28] sm:$0xf]
    %v144 = vld [vmem:[#allocation2 + $0x2c] sm:$0xf]
    %v145 = vld [vmem:[#allocation2 + $0x30] sm:$0xf]
    %v146 = vld [vmem:[#allocation2 + $0x34] sm:$0xf]
    %v147 = vld [vmem:[#allocation2 + $0x38] sm:$0xf]
    %v148 = vld [vmem:[#allocation2 + $0x3c] sm:$0xf]
    %v149 = vld [vmem:[#allocation2 + $0x40] sm:$0xf]
    %v150 = vld [vmem:[#allocation2 + $0x44] sm:$0xf]
    %v151 = vld [vmem:[#allocation2 + $0x48] sm:$0xf]
    %v152 = vld [vmem:[#allocation2 + $0x4c] sm:$0xf]
    %v153 = vld [vmem:[#allocation2 + $0x50] sm:$0xf]
    %v154 = vld [vmem:[#allocation2 + $0x54] sm:$0xf]
    %v155 = vld [vmem:[#allocation2 + $0x58] sm:$0xf]
    %v156 = vld [vmem:[#allocation2 + $0x5c] sm:$0xf]
    %v157 = vld [vmem:[#allocation2 + $0x60] sm:$0xf]
    %v158 = vld [vmem:[#allocation2 + $0x64] sm:$0xf]
    %v159 = vld [vmem:[#allocation2 + $0x68] sm:$0xf]
    %v160 = vld [vmem:[#allocation2 + $0x6c] sm:$0xf]
    %v161 = vld [vmem:[#allocation2 + $0x70] sm:$0xf]
    %v162 = vld [vmem:[#allocation2 + $0x74] sm:$0xf]
    %v163 = vld [vmem:[#allocation2 + $0x78] sm:$0xf]
    %v164 = vld [vmem:[#allocation2 + $0x7c] sm:$0xf]
    %v165 = vld [vmem:[%s4] sm:$0x1]
    %v167 = vperm.slane %v165, 0
    %v201 = vunpack.c.l.b16 %v133
    %v202 = vunpack.c.l.b16 %v134
    %v203 = vunpack.c.l.b16 %v135
    %v204 = vunpack.c.l.b16 %v136
    %v205 = vunpack.c.l.b16 %v137
    %v206 = vunpack.c.l.b16 %v138
    %v207 = vunpack.c.l.b16 %v139
    %v208 = vunpack.c.l.b16 %v140
    %v209 = vunpack.c.l.b16 %v141
    %v210 = vunpack.c.l.b16 %v142
    %v211 = vunpack.c.l.b16 %v143
    %v212 = vunpack.c.l.b16 %v144
    %v213 = vunpack.c.l.b16 %v145
    %v214 = vunpack.c.l.b16 %v146
    %v215 = vunpack.c.l.b16 %v147
    %v216 = vunpack.c.l.b16 %v148
    %v217 = vunpack.c.l.b16 %v149
    %v218 = vunpack.c.l.b16 %v150
    %v219 = vunpack.c.l.b16 %v151
    %v220 = vunpack.c.l.b16 %v152
    %v221 = vunpack.c.l.b16 %v153
    %v222 = vunpack.c.l.b16 %v154
    %v223 = vunpack.c.l.b16 %v155
    %v224 = vunpack.c.l.b16 %v156
    %v225 = vunpack.c.l.b16 %v157
    %v226 = vunpack.c.l.b16 %v158
    %v227 = vunpack.c.l.b16 %v159
    %v228 = vunpack.c.l.b16 %v160
    %v229 = vunpack.c.l.b16 %v161
    %v230 = vunpack.c.l.b16 %v162
    %v231 = vunpack.c.l.b16 %v163
    %v232 = vunpack.c.l.b16 %v164
    %v233 = vpack.c.b16 %v202, %v201
    %v234 = vpack.c.b16 %v204, %v203
    %v235 = vpack.c.b16 %v206, %v205
    %v236 = vpack.c.b16 %v208, %v207
    %v237 = vpack.c.b16 %v210, %v209
    %v238 = vpack.c.b16 %v212, %v211
    %v239 = vpack.c.b16 %v214, %v213
    %v240 = vpack.c.b16 %v216, %v215
    %v241 = vpack.c.b16 %v218, %v217
    %v242 = vpack.c.b16 %v220, %v219
    %v243 = vpack.c.b16 %v222, %v221
    %v244 = vpack.c.b16 %v224, %v223
    %v245 = vpack.c.b16 %v226, %v225
    %v246 = vpack.c.b16 %v228, %v227
    %v247 = vpack.c.b16 %v230, %v229
    %v248 = vpack.c.b16 %v232, %v231
    %265 = vmatpush.bf16.msra.mxu0 %v240
    %266 = vmatpush.bf16.msra.mxu0 %v239
    %267 = vmatpush.bf16.msra.mxu0 %v238
    %268 = vmatpush.bf16.msra.mxu0 %v237
    %269 = vmatpush.bf16.msra.mxu0 %v236
    %270 = vmatpush.bf16.msra.mxu0 %v235
    %271 = vmatpush.bf16.msra.mxu0 %v234
    %272 = vmatpush.bf16.msra.mxu0 %v233
    %273 = vmatmul.bf16.gmra.mxu0 %v131
    %v274 = vpop.f32.mrf.mxu0
    %v275 = vadd.f32 %v167, %v274
    %v276 = vpop.f32.mrf.mxu0
    %277 = vdwg.mxu0
    %278 = vmatpush.bf16.msra.mxu0 %v248
    %279 = vmatpush.bf16.msra.mxu0 %v247
    %280 = vmatpush.bf16.msra.mxu0 %v246
    %281 = vmatpush.bf16.msra.mxu0 %v245
    %282 = vmatpush.bf16.msra.mxu0 %v244
    %283 = vmatpush.bf16.msra.mxu0 %v243
    %284 = vmatpush.bf16.msra.mxu0 %v242
    %285 = vmatpush.bf16.msra.mxu0 %v241
    %286 = vmatmul.bf16.gmra.mxu0 %v132
    %v287 = vpop.f32.mrf.mxu0
    %v288 = vadd.f32 %v275, %v287
    %v289 = vpop.f32.mrf.mxu0
    %290 = vdwg.mxu0
    %v291 = vmax.f32 %v288, 0.0
    %v292 = vpack.c.bf16 %v291, %v291
    %v293 = vld [vmem:[%s5] sm:$0xf]
    %v294 = vld [vmem:[%s5 + $0x4] sm:$0xf]
    %v295 = vld [vmem:[%s5 + $0x8] sm:$0xf]
    %v296 = vld [vmem:[%s5 + $0xc] sm:$0xf]
    %v297 = vld [vmem:[%s5 + $0x10] sm:$0xf]
    %v298 = vld [vmem:[%s5 + $0x14] sm:$0xf]
    %v299 = vld [vmem:[%s5 + $0x18] sm:$0xf]
    %v300 = vld [vmem:[%s5 + $0x1c] sm:$0xf]
    %v301 = vld [vmem:[%s5 + $0x20] sm:$0xf]
    %v302 = vld [vmem:[%s5 + $0x24] sm:$0xf]
    %v303 = vld [vmem:[%s5 + $0x28] sm:$0xf]
    %v304 = vld [vmem:[%s5 + $0x2c] sm:$0xf]
    %v305 = vld [vmem:[%s5 + $0x30] sm:$0xf]
    %v306 = vld [vmem:[%s5 + $0x34] sm:$0xf]
    %v307 = vld [vmem:[%s5 + $0x38] sm:$0xf]
    %v308 = vld [vmem:[%s5 + $0x3c] sm:$0xf]
    %v309 = vld [vmem:[%s6] sm:$0x1]
    %v311 = vperm.slane %v309, 0
    %v329 = vunpack.c.l.b16 %v293
    %v330 = vunpack.c.l.b16 %v294
    %v331 = vunpack.c.l.b16 %v295
    %v332 = vunpack.c.l.b16 %v296
    %v333 = vunpack.c.l.b16 %v297
    %v334 = vunpack.c.l.b16 %v298
    %v335 = vunpack.c.l.b16 %v299
    %v336 = vunpack.c.l.b16 %v300
    %v337 = vunpack.c.l.b16 %v301
    %v338 = vunpack.c.l.b16 %v302
    %v339 = vunpack.c.l.b16 %v303
    %v340 = vunpack.c.l.b16 %v304
    %v341 = vunpack.c.l.b16 %v305
    %v342 = vunpack.c.l.b16 %v306
    %v343 = vunpack.c.l.b16 %v307
    %v344 = vunpack.c.l.b16 %v308
    %v345 = vpack.c.b16 %v330, %v329
    %v346 = vpack.c.b16 %v332, %v331
    %v347 = vpack.c.b16 %v334, %v333
    %v348 = vpack.c.b16 %v336, %v335
    %v349 = vpack.c.b16 %v338, %v337
    %v350 = vpack.c.b16 %v340, %v339
    %v351 = vpack.c.b16 %v342, %v341
    %v352 = vpack.c.b16 %v344, %v343
    %361 = vmatpush.bf16.msra.mxu0 %v352
    %362 = vmatpush.bf16.msra.mxu0 %v351
    %363 = vmatpush.bf16.msra.mxu0 %v350
    %364 = vmatpush.bf16.msra.mxu0 %v349
    %365 = vmatpush.bf16.msra.mxu0 %v348
    %366 = vmatpush.bf16.msra.mxu0 %v347
    %367 = vmatpush.bf16.msra.mxu0 %v346
    %368 = vmatpush.bf16.msra.mxu0 %v345
    %369 = vmatmul.bf16.gmra.mxu0 %v292
    %v370 = vpop.f32.mrf.mxu0
    %v371 = vadd.f32 %v311, %v370
    %v372 = vpop.f32.mrf.mxu0
    %373 = vdwg.mxu0
    %v374 = vsub.f32 0.0, %v371
    %v375 = vmul.f32 %v374, 1.442695
    %v376 = vpow.pop %v375
    %v377 = vadd.f32 %v376, 1.0
    %v378 = vrcp.pop %v377
    %v379 = vmul.f32 %v377, %v378
    %v380 = vsub.f32 1.0, %v379
    %v381 = vmul.f32 %v378, %v380
    %v382 = vadd.f32 %v378, %v381
    %vm383 = vweird.f32 %v377
    %vm384 = vweird.f32 %v378
    %vm385 = vmor %vm383, %vm384
    %v386 = vsel %vm385, %v378, %v382
    %v387 = vand.u32 2147483647, %v377
    %vm388 = vcmp.eq.f32.partialorder %v387, 8.507059e+37
    %v389 = vand.u32 %v377, 2147483648
    %v390 = vor.u32 1.1754944e-38, %v389
    %v391 = vsel %vm388, %v390, %v386
    %v392 = vmul.f32 1.0, %v391
    %vm393 = vcmask 80896
    %394 = vst.msk [vmem:[#allocation5] sm:$0xff] %vm393, %v392
    // Predicated region
    $region34: #{tpu_custom_call.1} parent=1 // pred_check
      _
    $region35: #{tpu_custom_call.1} parent=1 // pred_check_branch
      %396 = sbr.rel (0) target = $region37
    $region36: #{tpu_custom_call.1} parent=1 // pred_region
      %398 = vsyncadd [#allocation4], 0
      %s400 = sshll.u32 [#allocation5], 4
      %s401 = int_to_ptr.vmem [resolvable:$true] %s400
      %s402 = sshll.u32 %s7, 4
      %s403 = int_to_ptr.hbm [resolvable:$true] %s402
      %405 = dma.vmem_to_hbm [thread:$0]  %s401, 128, %s403, [#allocation4]
    $region37: #{tpu_custom_call.1} parent=1 // pred_fallthru
      _
    // Predicated region
    $region38: #{tpu_custom_call.1} parent=1 // pred_check
      _
    $region39: #{tpu_custom_call.1} parent=1 // pred_check_branch
      %407 = sbr.rel (0) target = $region41
    $region40: #{tpu_custom_call.1} parent=1 // pred_region
      %409 = dma.done [#allocation4], 128
    $region41: #{tpu_custom_call.1} parent=1 // pred_fallthru
      _
    %410 = vsyncpa [#allocation3], 1
    %411 = vsyncpa [#allocation4], 1

</llo_original>
